<compile_context>
chip_gen: v5e
topology: v5e:2x2
jax: 0.10.0
libtpu: 0.0.40
codegen_flags: <defaults>
</compile_context>

<pallas_src>
import math
from functools import partial

import jax
import jax.numpy as jnp
from jax import lax
from jax.experimental import pallas as pl
from jax.experimental.pallas import tpu as pltpu


def _round_up(v, m):
    return ((v + m - 1) // m) * m


def _rpn_head_kernel(xm_ref, xh_ref, w3_ref, bc_ref, whT_ref, bh_ref, out_ref):
    """One (batch, row-tile) grid step.

    xm_ref : (1, TH, Wp, C) bf16   padded-input rows [r*TH, r*TH+TH)
    xh_ref : (1, 2,  Wp, C) bf16   halo rows          [r*TH+TH, r*TH+TH+2)
    w3_ref : (3, 3C, C)     bf16   3x3 conv weight, per-dy, K ordered (dx, Cin)
    bc_ref : (1, C)         f32    conv bias
    whT_ref: (A5, C)        bf16   fused [cls | bbox] 1x1 weight, out-channel major
    bh_ref : (A5, 1)        f32    fused [cls | bbox] bias
    out_ref: (1, A5, TH*W)  f32    fused head output, channel-major / lane-dense
    """
    TH = xm_ref.shape[1]
    Wp = xm_ref.shape[2]
    C = xm_ref.shape[3]
    W = Wp - 2
    A5 = out_ref.shape[1]
    THt = TH - 2                       # rows computable from the main block alone

    xm = xm_ref[0]                     # (TH, Wp, C)

    def conv_head(src, nrows):
        # src: (nrows+2, Wp, C) bf16.  Returns the fused 1x1 head output for
        # `nrows` output rows, output-channel-major: (A5, nrows*W) f32 (no bias).
        acc = None
        for dy in range(3):
            rows = src[dy:dy + nrows]                                    # (nrows, Wp, C)
            patch = jnp.concatenate(
                [rows[:, dx:dx + W, :] for dx in range(3)], axis=-1)     # (nrows, W, 3C)
            patch = patch.reshape(nrows * W, 3 * C)
            contrib = jnp.dot(patch, w3_ref[dy],
                              preferred_element_type=jnp.float32)
            acc = contrib if dy == 0 else acc + contrib                  # SSA accumulate
        t = jnp.maximum(acc + bc_ref[...], 0.0)                          # (nrows*W, C) f32
        # Fused cls+bbox heads, computed output-channel-major so the final store
        # is lane-dense:  (A5, C) x (nrows*W, C)^T -> (A5, nrows*W).
        return lax.dot_general(whT_ref[...], t.astype(whT_ref.dtype),
                               (((1,), (1,)), ((), ())),
                               preferred_element_type=jnp.float32)

    # Rows [0, TH-2): fully covered by the main block -- no halo, no concat.
    head_top = conv_head(xm, THt)                                        # (A5, THt*W)
    # Rows [TH-2, TH): need the 2 halo rows; only a tiny 4-row strip is copied.
    strip = jnp.concatenate([xm[THt:], xh_ref[0]], axis=0)               # (4, Wp, C)
    head_bot = conv_head(strip, 2)                                       # (A5, 2*W)

    head = jnp.concatenate([head_top, head_bot], axis=-1) + bh_ref[...]  # (A5, TH*W)
    out_ref[...] = head.reshape(1, A5, TH * W).astype(out_ref.dtype)


def _pick_tile_rows(height, width, target_rows):
    """Pick the row-tile size TH (always a multiple of 8).

    * small maps get a single tile (no halo refetch, no per-step overhead),
    * otherwise TH is a multiple of max(8, 128/gcd(W,128)) so the flattened
      (TH*W) output block stays 128-lane aligned (unmasked stores),
    * prefer a TH that divides H so no padded tail rows need slicing off.
    """
    h8 = _round_up(height, 8)
    target = max(8, _round_up(target_rows, 8))
    if h8 <= target:
        return h8
    m = max(8, 128 // math.gcd(width, 128))
    th = max(m, (target // m) * m)
    if th >= h8:
        return h8
    for cand in range(th, m - 1, -m):            # prefer exact division
        if height % cand == 0:
            return cand
    return th


@partial(jax.jit, static_argnames=("block_rows",))
def rpn_head_single(feature_nchw, params, *, block_rows=32):
    """Run the RPN head on one NCHW feature map. Returns (logits, bbox) in NCHW.

    block_rows: target row-tile.  Keep <=32 on v7x (64 MiB VMEM/core); 48-64 is
    fine on v5e/v6e (128 MiB VMEM).
    """
    w_conv, b_conv, w_cls, b_cls, w_box, b_box = params
    N, C, H, W = feature_nchw.shape
    A = w_cls.shape[-1]
    A5 = A + w_box.shape[-1]           # = 5 * num_anchors

    TH = _pick_tile_rows(H, W, block_rows)
    assert TH % 8 == 0 and TH % 2 == 0, "halo index map requires an even row tile"
    R = pl.cdiv(H, TH)
    Hp = R * TH + 2                    # padded rows (top 1 + rows + bottom pad)
    Wp = W + 2

    # NCHW -> NHWC, zero-pad for the 3x3 "same" conv, cast matmul inputs to bf16.
    # All of this fuses into a single XLA pass under this jit.
    x = jnp.transpose(feature_nchw, (0, 2, 3, 1)).astype(jnp.bfloat16)
    x = jnp.pad(x, ((0, 0), (1, Hp - H - 1), (1, 1), (0, 0)))

    # Kernel-layout weights (tiny host-side reshapes).
    w3 = w_conv.reshape(3, 3 * C, C).astype(jnp.bfloat16)        # (dy, dx*C+ci, co)
    bc = b_conv.reshape(1, C).astype(jnp.float32)
    whT = jnp.concatenate([w_cls, w_box], axis=1).T.astype(jnp.bfloat16)   # (A5, C)
    bh = jnp.concatenate([b_cls, b_box], axis=1).reshape(A5, 1).astype(jnp.float32)

    # VMEM budget derived from the tile (double-buffered blocks + value
    # temporaries), clamped so it is valid on every generation (v7x: 64 MiB/TC).
    tile_in = (TH * Wp * C + 2 * Wp * C) * 2                     # bf16 main + halo
    tile_out = A5 * TH * W * 4
    weights = (3 * 3 * C * C + A5 * C) * 2 + (C + A5) * 4
    temporaries = 8 * TH * W * C * 4                             # patches / acc / relu
    vmem_limit = 2 * (tile_in + tile_out + weights) + temporaries + (4 << 20)
    vmem_limit = int(min(max(vmem_limit, 32 << 20), 96 << 20))

    grid_spec = pltpu.PrefetchScalarGridSpec(
        num_scalar_prefetch=0,
        grid=(N, R),
        in_specs=[
            # main row tile: padded rows [r*TH, r*TH+TH)
            pl.BlockSpec((1, TH, Wp, C), lambda n, r: (n, r, 0, 0)),
            # 2-row halo: padded rows [r*TH+TH, r*TH+TH+2)
            pl.BlockSpec((1, 2, Wp, C), lambda n, r: (n, (r + 1) * (TH // 2), 0, 0)),
            # grid-invariant operands (see TODO about pl.Buffered(1))
            pl.BlockSpec((3, 3 * C, C), lambda n, r: (0, 0, 0)),
            pl.BlockSpec((1, C), lambda n, r: (0, 0)),
            pl.BlockSpec((A5, C), lambda n, r: (0, 0)),
            pl.BlockSpec((A5, 1), lambda n, r: (0, 0)),
        ],
        out_specs=pl.BlockSpec((1, A5, TH * W), lambda n, r: (n, 0, r)),
    )

    out = pl.pallas_call(
        _rpn_head_kernel,
        out_shape=jax.ShapeDtypeStruct((N, A5, R * TH * W), jnp.float32),
        grid_spec=grid_spec,
        compiler_params=pltpu.CompilerParams(
            dimension_semantics=("parallel", "parallel"),
            vmem_limit_bytes=vmem_limit),
    )(x, x, w3, bc, whT, bh)

    # Output is already channel-major (NCHW-ordered): drop any padded tail rows,
    # un-flatten H*W, split the fused channel axis.  No transposes.
    if R * TH != H:
        out = out[:, :, :H * W]
    out = out.reshape(N, A5, H, W)
    return out[:, :A], out[:, A:]


def rpn_head_forward(features, params, *, block_rows=32):
    """features: list of NCHW arrays -> (list of logits, list of bbox_reg), NCHW."""
    logits_list, bbox_list = [], []
    for f in features:
        lg, bb = rpn_head_single(f, params, block_rows=block_rows)
        logits_list.append(lg)
        bbox_list.append(bb)
    return logits_list, bbox_list


def init_rpn_head_params(key, in_channels, num_anchors):
    """Deterministic init matching RPNHead.__init__: normal(std=0.01) weights, zero bias."""
    k1, k2, k3 = jax.random.split(key, 3)
    # 3x3 weight in HWIO (kh, kw, Cin, Cout); 1x1 weights as (Cin, Cout).
    w_conv = 0.01 * jax.random.normal(k1, (3, 3, in_channels, in_channels), jnp.float32)
    b_conv = jnp.zeros((1, in_channels), jnp.float32)
    w_cls = 0.01 * jax.random.normal(k2, (in_channels, num_anchors), jnp.float32)
    b_cls = jnp.zeros((1, num_anchors), jnp.float32)
    w_box = 0.01 * jax.random.normal(k3, (in_channels, num_anchors * 4), jnp.float32)
    b_box = jnp.zeros((1, num_anchors * 4), jnp.float32)
    return (w_conv, b_conv, w_cls, b_cls, w_box, b_box)


def _reference_single(feature_nchw, params):
    """Pure-JAX reference (lax.conv) using the same bf16-operand / f32-accum numerics."""
    w_conv, b_conv, w_cls, b_cls, w_box, b_box = params
    dn = ("NCHW", "HWIO", "NCHW")
    xb = feature_nchw.astype(jnp.bfloat16)
    t = lax.conv_general_dilated(xb, w_conv.astype(jnp.bfloat16), (1, 1), "SAME",
                                 dimension_numbers=dn,
                                 preferred_element_type=jnp.float32)
    t = jnp.maximum(t + b_conv.reshape(1, -1, 1, 1), 0.0)
    tb = t.astype(jnp.bfloat16)
    lg = lax.conv_general_dilated(tb, w_cls.astype(jnp.bfloat16)[None, None], (1, 1),
                                  "SAME", dimension_numbers=dn,
                                  preferred_element_type=jnp.float32) + b_cls.reshape(1, -1, 1, 1)
    bb = lax.conv_general_dilated(tb, w_box.astype(jnp.bfloat16)[None, None], (1, 1),
                                  "SAME", dimension_numbers=dn,
                                  preferred_element_type=jnp.float32) + b_box.reshape(1, -1, 1, 1)
    return lg, bb


if __name__ == "__main__":
    in_channels = 4
    num_anchors = 3
    key = jax.random.PRNGKey(0)
    kp, kx1, kx2 = jax.random.split(key, 3)

    params = init_rpn_head_params(kp, in_channels, num_anchors)

    # Two feature maps (like an FPN list), NCHW.
    feat0 = jax.random.normal(kx1, (2, in_channels, 16, 16), jnp.float32)
    feat1 = jax.random.normal(kx2, (2, in_channels, 8, 8), jnp.float32)
    features = [feat0, feat1]

    # block_rows=8 so the 16x16 map exercises the multi-row-tile + halo path (R=2).
    logits_list, bbox_list = rpn_head_forward(features, params, block_rows=8)
    jax.block_until_ready(logits_list)
    jax.block_until_ready(bbox_list)

    # Sanity-check against a pure-JAX conv reference (same bf16/f32 numerics).
    for f, lg, bb in zip(features, logits_list, bbox_list):
        lg_ref, bb_ref = _reference_single(f, params)
        assert lg.shape == lg_ref.shape and bb.shape == bb_ref.shape
        assert jnp.allclose(lg, lg_ref, atol=1e-4, rtol=1e-3), "logits mismatch"
        assert jnp.allclose(bb, bb_ref, atol=1e-4, rtol=1e-3), "bbox mismatch"

    print("KERNEL_OK")
</pallas_src>

<mosaic_0001>
module attributes {stable_mosaic.version = 11 : i64} {
  func.func @_rpn_head_kernel(%arg0: i32, %arg1: i32, %arg2: memref<1x8x18x4xbf16, #tpu.memory_space<vmem>>, %arg3: memref<1x2x18x4xbf16, #tpu.memory_space<vmem>>, %arg4: memref<3x12x4xbf16, #tpu.memory_space<vmem>>, %arg5: memref<1x4xf32, #tpu.memory_space<vmem>>, %arg6: memref<15x4xbf16, #tpu.memory_space<vmem>>, %arg7: memref<15x1xf32, #tpu.memory_space<vmem>>, %arg8: memref<1x15x128xf32, #tpu.memory_space<vmem>>) attributes {dimension_semantics = [#tpu.dimension_semantics<parallel>, #tpu.dimension_semantics<parallel>], iteration_bounds = array<i64: 2, 2>, scalar_prefetch = 0 : i64, scratch_operands = 0 : i64, tpu.core_type = #tpu.core_type<tc>, window_params = [{transform_indices = @transform_0, window_bounds = array<i64: 1, 8, 18, 4>}, {transform_indices = @transform_1, window_bounds = array<i64: 1, 2, 18, 4>}, {pipeline_mode = #tpu.pipeline_mode<synchronous>, transform_indices = @transform_2, window_bounds = array<i64: 3, 12, 4>}, {pipeline_mode = #tpu.pipeline_mode<synchronous>, transform_indices = @transform_3, window_bounds = array<i64: 1, 4>}, {pipeline_mode = #tpu.pipeline_mode<synchronous>, transform_indices = @transform_4, window_bounds = array<i64: 15, 4>}, {pipeline_mode = #tpu.pipeline_mode<synchronous>, transform_indices = @transform_5, window_bounds = array<i64: 15, 1>}, {transform_indices = @transform_6, window_bounds = array<i64: 1, 15, 128>}]} {
    %c0 = arith.constant 0 : index
    %c0_0 = arith.constant 0 : index
    %c0_1 = arith.constant 0 : index
    %c0_2 = arith.constant 0 : index
    %0 = vector.load %arg2[%c0, %c0_0, %c0_1, %c0_2] : memref<1x8x18x4xbf16, #tpu.memory_space<vmem>>, vector<1x8x18x4xbf16>
    %1 = vector.shape_cast %0 : vector<1x8x18x4xbf16> to vector<8x18x4xbf16>
    %2 = vector.extract_strided_slice %1 {offsets = [0, 0, 0], sizes = [6, 18, 4], strides = [1, 1, 1]} : vector<8x18x4xbf16> to vector<6x18x4xbf16>
    %3 = vector.extract_strided_slice %2 {offsets = [0, 0, 0], sizes = [6, 16, 4], strides = [1, 1, 1]} : vector<6x18x4xbf16> to vector<6x16x4xbf16>
    %4 = vector.extract_strided_slice %2 {offsets = [0, 1, 0], sizes = [6, 16, 4], strides = [1, 1, 1]} : vector<6x18x4xbf16> to vector<6x16x4xbf16>
    %5 = vector.extract_strided_slice %2 {offsets = [0, 2, 0], sizes = [6, 16, 4], strides = [1, 1, 1]} : vector<6x18x4xbf16> to vector<6x16x4xbf16>
    %6 = tpu.concatenate %3, %4, %5 in 2 : vector<6x16x4xbf16>, vector<6x16x4xbf16>, vector<6x16x4xbf16> -> vector<6x16x12xbf16>
    %7 = vector.shape_cast %6 : vector<6x16x12xbf16> to vector<96x12xbf16>
    %c0_3 = arith.constant 0 : index
    %c0_4 = arith.constant 0 : index
    %c0_5 = arith.constant 0 : index
    %8 = vector.load %arg4[%c0_3, %c0_4, %c0_5] : memref<3x12x4xbf16, #tpu.memory_space<vmem>>, vector<1x12x4xbf16>
    %9 = vector.shape_cast %8 : vector<1x12x4xbf16> to vector<12x4xbf16>
    %cst = arith.constant dense<0.000000e+00> : vector<96x4xf32>
    %10 = tpu.matmul %7, %9, %cst {dimension_numbers = #tpu.dot_dimension_numbers<[1], [0], [0], [1], [0, 0, 1, 1], [], []>} : vector<96x12xbf16>, vector<12x4xbf16>, vector<96x4xf32> -> vector<96x4xf32>
    %11 = vector.extract_strided_slice %1 {offsets = [1, 0, 0], sizes = [6, 18, 4], strides = [1, 1, 1]} : vector<8x18x4xbf16> to vector<6x18x4xbf16>
    %12 = vector.extract_strided_slice %11 {offsets = [0, 0, 0], sizes = [6, 16, 4], strides = [1, 1, 1]} : vector<6x18x4xbf16> to vector<6x16x4xbf16>
    %13 = vector.extract_strided_slice %11 {offsets = [0, 1, 0], sizes = [6, 16, 4], strides = [1, 1, 1]} : vector<6x18x4xbf16> to vector<6x16x4xbf16>
    %14 = vector.extract_strided_slice %11 {offsets = [0, 2, 0], sizes = [6, 16, 4], strides = [1, 1, 1]} : vector<6x18x4xbf16> to vector<6x16x4xbf16>
    %15 = tpu.concatenate %12, %13, %14 in 2 : vector<6x16x4xbf16>, vector<6x16x4xbf16>, vector<6x16x4xbf16> -> vector<6x16x12xbf16>
    %16 = vector.shape_cast %15 : vector<6x16x12xbf16> to vector<96x12xbf16>
    %c1 = arith.constant 1 : index
    %c0_6 = arith.constant 0 : index
    %c0_7 = arith.constant 0 : index
    %17 = vector.load %arg4[%c1, %c0_6, %c0_7] : memref<3x12x4xbf16, #tpu.memory_space<vmem>>, vector<1x12x4xbf16>
    %18 = vector.shape_cast %17 : vector<1x12x4xbf16> to vector<12x4xbf16>
    %cst_8 = arith.constant dense<0.000000e+00> : vector<96x4xf32>
    %19 = tpu.matmul %16, %18, %cst_8 {dimension_numbers = #tpu.dot_dimension_numbers<[1], [0], [0], [1], [0, 0, 1, 1], [], []>} : vector<96x12xbf16>, vector<12x4xbf16>, vector<96x4xf32> -> vector<96x4xf32>
    %20 = arith.addf %10, %19 : vector<96x4xf32>
    %21 = vector.extract_strided_slice %1 {offsets = [2, 0, 0], sizes = [6, 18, 4], strides = [1, 1, 1]} : vector<8x18x4xbf16> to vector<6x18x4xbf16>
    %22 = vector.extract_strided_slice %21 {offsets = [0, 0, 0], sizes = [6, 16, 4], strides = [1, 1, 1]} : vector<6x18x4xbf16> to vector<6x16x4xbf16>
    %23 = vector.extract_strided_slice %21 {offsets = [0, 1, 0], sizes = [6, 16, 4], strides = [1, 1, 1]} : vector<6x18x4xbf16> to vector<6x16x4xbf16>
    %24 = vector.extract_strided_slice %21 {offsets = [0, 2, 0], sizes = [6, 16, 4], strides = [1, 1, 1]} : vector<6x18x4xbf16> to vector<6x16x4xbf16>
    %25 = tpu.concatenate %22, %23, %24 in 2 : vector<6x16x4xbf16>, vector<6x16x4xbf16>, vector<6x16x4xbf16> -> vector<6x16x12xbf16>
    %26 = vector.shape_cast %25 : vector<6x16x12xbf16> to vector<96x12xbf16>
    %c2 = arith.constant 2 : index
    %c0_9 = arith.constant 0 : index
    %c0_10 = arith.constant 0 : index
    %27 = vector.load %arg4[%c2, %c0_9, %c0_10] : memref<3x12x4xbf16, #tpu.memory_space<vmem>>, vector<1x12x4xbf16>
    %28 = vector.shape_cast %27 : vector<1x12x4xbf16> to vector<12x4xbf16>
    %cst_11 = arith.constant dense<0.000000e+00> : vector<96x4xf32>
    %29 = tpu.matmul %26, %28, %cst_11 {dimension_numbers = #tpu.dot_dimension_numbers<[1], [0], [0], [1], [0, 0, 1, 1], [], []>} : vector<96x12xbf16>, vector<12x4xbf16>, vector<96x4xf32> -> vector<96x4xf32>
    %30 = arith.addf %20, %29 : vector<96x4xf32>
    %c0_12 = arith.constant 0 : index
    %c0_13 = arith.constant 0 : index
    %31 = vector.load %arg5[%c0_12, %c0_13] : memref<1x4xf32, #tpu.memory_space<vmem>>, vector<1x4xf32>
    %32 = vector.broadcast %31 : vector<1x4xf32> to vector<96x4xf32>
    %33 = arith.addf %30, %32 : vector<96x4xf32>
    %cst_14 = arith.constant 0.000000e+00 : f32
    %34 = vector.broadcast %cst_14 : f32 to vector<96x4xf32>
    %35 = arith.maximumf %33, %34 : vector<96x4xf32>
    %c0_15 = arith.constant 0 : index
    %c0_16 = arith.constant 0 : index
    %36 = vector.load %arg6[%c0_15, %c0_16] : memref<15x4xbf16, #tpu.memory_space<vmem>>, vector<15x4xbf16>
    %37 = arith.truncf %35 : vector<96x4xf32> to vector<96x4xbf16>
    %cst_17 = arith.constant dense<0.000000e+00> : vector<15x96xf32>
    %38 = tpu.matmul %36, %37, %cst_17 {dimension_numbers = #tpu.dot_dimension_numbers<[1], [1], [0], [0], [0, 0, 1, 0], [], []>} : vector<15x4xbf16>, vector<96x4xbf16>, vector<15x96xf32> -> vector<15x96xf32>
    %39 = vector.extract_strided_slice %1 {offsets = [6, 0, 0], sizes = [2, 18, 4], strides = [1, 1, 1]} : vector<8x18x4xbf16> to vector<2x18x4xbf16>
    %c0_18 = arith.constant 0 : index
    %c0_19 = arith.constant 0 : index
    %c0_20 = arith.constant 0 : index
    %c0_21 = arith.constant 0 : index
    %40 = vector.load %arg3[%c0_18, %c0_19, %c0_20, %c0_21] : memref<1x2x18x4xbf16, #tpu.memory_space<vmem>>, vector<1x2x18x4xbf16>
    %41 = vector.shape_cast %40 : vector<1x2x18x4xbf16> to vector<2x18x4xbf16>
    %42 = tpu.concatenate %39, %41 in 0 : vector<2x18x4xbf16>, vector<2x18x4xbf16> -> vector<4x18x4xbf16>
    %43 = vector.extract_strided_slice %42 {offsets = [0, 0, 0], sizes = [2, 18, 4], strides = [1, 1, 1]} : vector<4x18x4xbf16> to vector<2x18x4xbf16>
    %44 = vector.extract_strided_slice %43 {offsets = [0, 0, 0], sizes = [2, 16, 4], strides = [1, 1, 1]} : vector<2x18x4xbf16> to vector<2x16x4xbf16>
    %45 = vector.extract_strided_slice %43 {offsets = [0, 1, 0], sizes = [2, 16, 4], strides = [1, 1, 1]} : vector<2x18x4xbf16> to vector<2x16x4xbf16>
    %46 = vector.extract_strided_slice %43 {offsets = [0, 2, 0], sizes = [2, 16, 4], strides = [1, 1, 1]} : vector<2x18x4xbf16> to vector<2x16x4xbf16>
    %47 = tpu.concatenate %44, %45, %46 in 2 : vector<2x16x4xbf16>, vector<2x16x4xbf16>, vector<2x16x4xbf16> -> vector<2x16x12xbf16>
    %48 = vector.shape_cast %47 : vector<2x16x12xbf16> to vector<32x12xbf16>
    %c0_22 = arith.constant 0 : index
    %c0_23 = arith.constant 0 : index
    %c0_24 = arith.constant 0 : index
    %49 = vector.load %arg4[%c0_22, %c0_23, %c0_24] : memref<3x12x4xbf16, #tpu.memory_space<vmem>>, vector<1x12x4xbf16>
    %50 = vector.shape_cast %49 : vector<1x12x4xbf16> to vector<12x4xbf16>
    %cst_25 = arith.constant dense<0.000000e+00> : vector<32x4xf32>
    %51 = tpu.matmul %48, %50, %cst_25 {dimension_numbers = #tpu.dot_dimension_numbers<[1], [0], [0], [1], [0, 0, 1, 1], [], []>} : vector<32x12xbf16>, vector<12x4xbf16>, vector<32x4xf32> -> vector<32x4xf32>
    %52 = vector.extract_strided_slice %42 {offsets = [1, 0, 0], sizes = [2, 18, 4], strides = [1, 1, 1]} : vector<4x18x4xbf16> to vector<2x18x4xbf16>
    %53 = vector.extract_strided_slice %52 {offsets = [0, 0, 0], sizes = [2, 16, 4], strides = [1, 1, 1]} : vector<2x18x4xbf16> to vector<2x16x4xbf16>
    %54 = vector.extract_strided_slice %52 {offsets = [0, 1, 0], sizes = [2, 16, 4], strides = [1, 1, 1]} : vector<2x18x4xbf16> to vector<2x16x4xbf16>
    %55 = vector.extract_strided_slice %52 {offsets = [0, 2, 0], sizes = [2, 16, 4], strides = [1, 1, 1]} : vector<2x18x4xbf16> to vector<2x16x4xbf16>
    %56 = tpu.concatenate %53, %54, %55 in 2 : vector<2x16x4xbf16>, vector<2x16x4xbf16>, vector<2x16x4xbf16> -> vector<2x16x12xbf16>
    %57 = vector.shape_cast %56 : vector<2x16x12xbf16> to vector<32x12xbf16>
    %c1_26 = arith.constant 1 : index
    %c0_27 = arith.constant 0 : index
    %c0_28 = arith.constant 0 : index
    %58 = vector.load %arg4[%c1_26, %c0_27, %c0_28] : memref<3x12x4xbf16, #tpu.memory_space<vmem>>, vector<1x12x4xbf16>
    %59 = vector.shape_cast %58 : vector<1x12x4xbf16> to vector<12x4xbf16>
    %cst_29 = arith.constant dense<0.000000e+00> : vector<32x4xf32>
    %60 = tpu.matmul %57, %59, %cst_29 {dimension_numbers = #tpu.dot_dimension_numbers<[1], [0], [0], [1], [0, 0, 1, 1], [], []>} : vector<32x12xbf16>, vector<12x4xbf16>, vector<32x4xf32> -> vector<32x4xf32>
    %61 = arith.addf %51, %60 : vector<32x4xf32>
    %62 = vector.extract_strided_slice %42 {offsets = [2, 0, 0], sizes = [2, 18, 4], strides = [1, 1, 1]} : vector<4x18x4xbf16> to vector<2x18x4xbf16>
    %63 = vector.extract_strided_slice %62 {offsets = [0, 0, 0], sizes = [2, 16, 4], strides = [1, 1, 1]} : vector<2x18x4xbf16> to vector<2x16x4xbf16>
    %64 = vector.extract_strided_slice %62 {offsets = [0, 1, 0], sizes = [2, 16, 4], strides = [1, 1, 1]} : vector<2x18x4xbf16> to vector<2x16x4xbf16>
    %65 = vector.extract_strided_slice %62 {offsets = [0, 2, 0], sizes = [2, 16, 4], strides = [1, 1, 1]} : vector<2x18x4xbf16> to vector<2x16x4xbf16>
    %66 = tpu.concatenate %63, %64, %65 in 2 : vector<2x16x4xbf16>, vector<2x16x4xbf16>, vector<2x16x4xbf16> -> vector<2x16x12xbf16>
    %67 = vector.shape_cast %66 : vector<2x16x12xbf16> to vector<32x12xbf16>
    %c2_30 = arith.constant 2 : index
    %c0_31 = arith.constant 0 : index
    %c0_32 = arith.constant 0 : index
    %68 = vector.load %arg4[%c2_30, %c0_31, %c0_32] : memref<3x12x4xbf16, #tpu.memory_space<vmem>>, vector<1x12x4xbf16>
    %69 = vector.shape_cast %68 : vector<1x12x4xbf16> to vector<12x4xbf16>
    %cst_33 = arith.constant dense<0.000000e+00> : vector<32x4xf32>
    %70 = tpu.matmul %67, %69, %cst_33 {dimension_numbers = #tpu.dot_dimension_numbers<[1], [0], [0], [1], [0, 0, 1, 1], [], []>} : vector<32x12xbf16>, vector<12x4xbf16>, vector<32x4xf32> -> vector<32x4xf32>
    %71 = arith.addf %61, %70 : vector<32x4xf32>
    %c0_34 = arith.constant 0 : index
    %c0_35 = arith.constant 0 : index
    %72 = vector.load %arg5[%c0_34, %c0_35] : memref<1x4xf32, #tpu.memory_space<vmem>>, vector<1x4xf32>
    %73 = vector.broadcast %72 : vector<1x4xf32> to vector<32x4xf32>
    %74 = arith.addf %71, %73 : vector<32x4xf32>
    %cst_36 = arith.constant 0.000000e+00 : f32
    %75 = vector.broadcast %cst_36 : f32 to vector<32x4xf32>
    %76 = arith.maximumf %74, %75 : vector<32x4xf32>
    %c0_37 = arith.constant 0 : index
    %c0_38 = arith.constant 0 : index
    %77 = vector.load %arg6[%c0_37, %c0_38] : memref<15x4xbf16, #tpu.memory_space<vmem>>, vector<15x4xbf16>
    %78 = arith.truncf %76 : vector<32x4xf32> to vector<32x4xbf16>
    %cst_39 = arith.constant dense<0.000000e+00> : vector<15x32xf32>
    %79 = tpu.matmul %77, %78, %cst_39 {dimension_numbers = #tpu.dot_dimension_numbers<[1], [1], [0], [0], [0, 0, 1, 0], [], []>} : vector<15x4xbf16>, vector<32x4xbf16>, vector<15x32xf32> -> vector<15x32xf32>
    %80 = tpu.concatenate %38, %79 in 1 : vector<15x96xf32>, vector<15x32xf32> -> vector<15x128xf32>
    %c0_40 = arith.constant 0 : index
    %c0_41 = arith.constant 0 : index
    %81 = vector.load %arg7[%c0_40, %c0_41] : memref<15x1xf32, #tpu.memory_space<vmem>>, vector<15x1xf32>
    %82 = vector.broadcast %81 : vector<15x1xf32> to vector<15x128xf32>
    %83 = arith.addf %80, %82 : vector<15x128xf32>
    %84 = vector.shape_cast %83 : vector<15x128xf32> to vector<1x15x128xf32>
    %c0_42 = arith.constant 0 : index
    %c0_43 = arith.constant 0 : index
    %c0_44 = arith.constant 0 : index
    %85 = vector.load %arg8[%c0_42, %c0_43, %c0_44] : memref<1x15x128xf32, #tpu.memory_space<vmem>>, vector<1x15x128xf32>
    tpu.vector_store %arg8[%c0_42, %c0_43, %c0_44], %84 {strides = array<i32>} : memref<1x15x128xf32, #tpu.memory_space<vmem>>, vector<1x15x128xf32>,
    return
  }
  func.func @transform_0(%arg0: i32, %arg1: i32) -> (i32, i32, i32, i32) {
    %c0_i32 = arith.constant 0 : i32
    %c0_i32_0 = arith.constant 0 : i32
    %c0_i32_1 = arith.constant 0 : i32
    return %arg0, %arg1, %c0_i32, %c0_i32_0 : i32, i32, i32, i32
  }
  func.func @transform_1(%arg0: i32, %arg1: i32) -> (i32, i32, i32, i32) {
    %c1_i32 = arith.constant 1 : i32
    %0 = arith.addi %arg1, %c1_i32 : i32
    %c4_i32 = arith.constant 4 : i32
    %1 = arith.muli %0, %c4_i32 : i32
    %c0_i32 = arith.constant 0 : i32
    %c0_i32_0 = arith.constant 0 : i32
    %c0_i32_1 = arith.constant 0 : i32
    return %arg0, %1, %c0_i32, %c0_i32_0 : i32, i32, i32, i32
  }
  func.func @transform_2(%arg0: i32, %arg1: i32) -> (i32, i32, i32) {
    %c0_i32 = arith.constant 0 : i32
    %c0_i32_0 = arith.constant 0 : i32
    %c0_i32_1 = arith.constant 0 : i32
    %c0_i32_2 = arith.constant 0 : i32
    return %c0_i32, %c0_i32_0, %c0_i32_1 : i32, i32, i32
  }
  func.func @transform_3(%arg0: i32, %arg1: i32) -> (i32, i32) {
    %c0_i32 = arith.constant 0 : i32
    %c0_i32_0 = arith.constant 0 : i32
    %c0_i32_1 = arith.constant 0 : i32
    return %c0_i32, %c0_i32_0 : i32, i32
  }
  func.func @transform_4(%arg0: i32, %arg1: i32) -> (i32, i32) {
    %c0_i32 = arith.constant 0 : i32
    %c0_i32_0 = arith.constant 0 : i32
    %c0_i32_1 = arith.constant 0 : i32
    return %c0_i32, %c0_i32_0 : i32, i32
  }
  func.func @transform_5(%arg0: i32, %arg1: i32) -> (i32, i32) {
    %c0_i32 = arith.constant 0 : i32
    %c0_i32_0 = arith.constant 0 : i32
    %c0_i32_1 = arith.constant 0 : i32
    return %c0_i32, %c0_i32_0 : i32, i32
  }
  func.func @transform_6(%arg0: i32, %arg1: i32) -> (i32, i32, i32) {
    %c0_i32 = arith.constant 0 : i32
    %c0_i32_0 = arith.constant 0 : i32
    return %arg0, %c0_i32, %arg1 : i32, i32, i32
  }
}

</mosaic_0001>

<llo_original>
// kernel: rpn_head_single.1
$region0: #{rpn_head_single.1}
  #allocation0 [shape = 'u32[]', space=smem, size = 0x4, offset = 0x4, fixed_abs, tag = 'smem constant byte address 0x4 - core index']
  #allocation1 [shape = 'u32[72,128]{1,0:T(1,128)}', space=vmem, size = 0x9000, scoped, tag = 'internal scratch']
  %s0 = inlined_call_operand.vmem [shape: bf16[2,18,18,4], index: 0, kind: input, shape index: {}, may-alias: {0,1}]
  %s1 = inlined_call_operand.vmem [shape: bf16[2,18,18,4], index: 1, kind: input, shape index: {}, may-alias: {0,1}]
  %s2 = inlined_call_operand.vmem [shape: bf16[3,12,4], index: 2, kind: input, shape index: {}]
  %s3 = inlined_call_operand.vmem [shape: f32[1,4], index: 3, kind: input, shape index: {}]
  %s4 = inlined_call_operand.vmem [shape: bf16[15,4], index: 4, kind: input, shape index: {}]
  %s5 = inlined_call_operand.vmem [shape: f32[15,1], index: 5, kind: input, shape index: {}]
  %s6 = inlined_call_operand.vmem [shape: f32[2,15,256], index: 6, kind: output, shape index: {}]
  %s7 = sld [smem:[#allocation0]]
  $region91: #{rpn_head_single.1} parent=0
    _
  %s9 = ssub.s32 1, %s7
  %s10 = scalar_select 0, %s9, %s7
  $region1: #{rpn_head_single.1} parent=0
    #allocation2 [shape = 'u8[16384]{0}', space=vmem, size = 0x4000, scoped, tag = 'output window, operand 0']
    loop: start=0, step=1, limit=6
    $region2: #{rpn_head_single.1} parent=1 // loop_pre_header
      _
    $region3: #{rpn_head_single.1} parent=1 // loop_header
      %s12 = sphi 0, %s16
      %p13 = scmp.ge.s32.totalorder %s12, 6
      %s19 = sphi 0, %s31
      %s20 = sphi 0, %s27
      %s21 = sphi 0, %s19
      %s22 = sphi 0, %s20
      %s23 = sphi 0, %s21
      %s24 = sphi 0, %s22
      %s36 = sphi 0, %s38
      %s39 = sphi 0, %s36
      %s40 = sphi 0, %s39
      %s56 = sphi 0, %s40
      %s68 = sphi 0, %s70
      %s71 = sphi 0, %s68
      %s72 = sphi 0, %s71
      %s88 = sphi 0, %s72
      %s92 = sphi 0, %s92
      %s94 = sphi 0, %s92
      %s95 = sphi 0, %s94
      %s109 = sphi 0, %s95
      %s113 = sphi 0, %s113
      %s115 = sphi 0, %s113
      %s116 = sphi 0, %s115
      %s130 = sphi 0, %s116
      %s134 = sphi 0, %s134
      %s136 = sphi 0, %s134
      %s137 = sphi 0, %s136
      %s151 = sphi 0, %s137
      %s155 = sphi 0, %s155
      %s157 = sphi 0, %s155
      %s158 = sphi 0, %s157
      %s172 = sphi 0, %s158
      %s180 = sphi 0, %s182
      %s183 = sphi 0, %s180
      %s184 = sphi 0, %s183
      %s200 = sphi 0, %s184
    $region4: #{rpn_head_single.1} parent=1 // loop_header_branch
      %15 = sbr.rel (%p13) target = $region8
    $region5: #{rpn_head_single.1} parent=1 // loop_body
      %s17 = ssub.s32 %s12, 1
      %s18 = ssub.s32 %s12, 2
      %s25 = sadd.s32 1, %s20
      %p26 = scmp.ge.s32.totalorder %s25, 2
      %s27 = scalar_select %p26, 0, %s25
      %s28 = sadd.s32 1, %s19
      %s29 = scalar_select %p26, %s28, %s19
      %p30 = scmp.ge.s32.totalorder %s29, 2
      %s31 = scalar_select %p30, 0, %s29
      %s32 = ssub.s32 %s19, %s31
      %s33 = ssub.s32 %s20, %s27
      %s34 = sor.u32 %s32, %s33
      %p35 = scmp.eq.s32.totalorder %s34, 0
      %s37 = sadd.s32 %s36, 1
      %s38 = scalar_select %p35, %s36, %s37
      %p41 = pneg %p35
      %p42 = scmp.eq.s32.totalorder %s12, 3
      %p43 = por %p41, %p42
      %p44 = scmp.ne.s32.totalorder %s36, %s39
      %p45 = scmp.eq.s32.totalorder %s12, 0
      %p46 = por %p44, %p45
      %p47 = scmp.ne.s32.totalorder %s36, %s39
      %p48 = scmp.eq.s32.totalorder %s17, 3
      %p49 = por %p47, %p48
      %p50 = scmp.ne.s32.totalorder %s39, %s40
      %p51 = scmp.eq.s32.totalorder %s17, 0
      %p52 = por %p50, %p51
      %p53 = scmp.ne.s32.totalorder %s39, %s40
      %p54 = scmp.eq.s32.totalorder %s18, 3
      %p55 = por %p53, %p54
      %p57 = scmp.ne.s32.totalorder %s40, %s56
      %p58 = scmp.eq.s32.totalorder %s18, 0
      %p59 = por %p57, %p58
      %s60 = sadd.s32 %s20, 1
      %s61 = smul.u32 %s60, 4
      %s62 = sadd.s32 %s27, 1
      %s63 = smul.u32 %s62, 4
      %s64 = ssub.s32 %s19, %s31
      %s65 = ssub.s32 %s61, %s63
      %s66 = sor.u32 %s64, %s65
      %p67 = scmp.eq.s32.totalorder %s66, 0
      %s69 = sadd.s32 %s68, 1
      %s70 = scalar_select %p67, %s68, %s69
      %p73 = pneg %p67
      %p74 = scmp.eq.s32.totalorder %s12, 3
      %p75 = por %p73, %p74
      %p76 = scmp.ne.s32.totalorder %s68, %s71
      %p77 = scmp.eq.s32.totalorder %s12, 0
      %p78 = por %p76, %p77
      %p79 = scmp.ne.s32.totalorder %s68, %s71
      %p80 = scmp.eq.s32.totalorder %s17, 3
      %p81 = por %p79, %p80
      %p82 = scmp.ne.s32.totalorder %s71, %s72
      %p83 = scmp.eq.s32.totalorder %s17, 0
      %p84 = por %p82, %p83
      %p85 = scmp.ne.s32.totalorder %s71, %s72
      %p86 = scmp.eq.s32.totalorder %s18, 3
      %p87 = por %p85, %p86
      %p89 = scmp.ne.s32.totalorder %s72, %s88
      %p90 = scmp.eq.s32.totalorder %s18, 0
      %p91 = por %p89, %p90
      %s93 = sadd.s32 %s92, 1
      %p96 = scmp.eq.s32.totalorder %s12, 3
      %p97 = scmp.ne.s32.totalorder %s92, %s94
      %p98 = scmp.eq.s32.totalorder %s12, 0
      %p99 = por %p97, %p98
      %p100 = scmp.ne.s32.totalorder %s92, %s94
      %p101 = scmp.eq.s32.totalorder %s17, 3
      %p102 = por %p100, %p101
      %p103 = scmp.ne.s32.totalorder %s94, %s95
      %p104 = scmp.eq.s32.totalorder %s17, 0
      %p105 = por %p103, %p104
      %p106 = scmp.ne.s32.totalorder %s94, %s95
      %p107 = scmp.eq.s32.totalorder %s18, 3
      %p108 = por %p106, %p107
      %p110 = scmp.ne.s32.totalorder %s95, %s109
      %p111 = scmp.eq.s32.totalorder %s18, 0
      %p112 = por %p110, %p111
      %s114 = sadd.s32 %s113, 1
      %p117 = scmp.eq.s32.totalorder %s12, 3
      %p118 = scmp.ne.s32.totalorder %s113, %s115
      %p119 = scmp.eq.s32.totalorder %s12, 0
      %p120 = por %p118, %p119
      %p121 = scmp.ne.s32.totalorder %s113, %s115
      %p122 = scmp.eq.s32.totalorder %s17, 3
      %p123 = por %p121, %p122
      %p124 = scmp.ne.s32.totalorder %s115, %s116
      %p125 = scmp.eq.s32.totalorder %s17, 0
      %p126 = por %p124, %p125
      %p127 = scmp.ne.s32.totalorder %s115, %s116
      %p128 = scmp.eq.s32.totalorder %s18, 3
      %p129 = por %p127, %p128
      %p131 = scmp.ne.s32.totalorder %s116, %s130
      %p132 = scmp.eq.s32.totalorder %s18, 0
      %p133 = por %p131, %p132
      %s135 = sadd.s32 %s134, 1
      %p138 = scmp.eq.s32.totalorder %s12, 3
      %p139 = scmp.ne.s32.totalorder %s134, %s136
      %p140 = scmp.eq.s32.totalorder %s12, 0
      %p141 = por %p139, %p140
      %p142 = scmp.ne.s32.totalorder %s134, %s136
      %p143 = scmp.eq.s32.totalorder %s17, 3
      %p144 = por %p142, %p143
      %p145 = scmp.ne.s32.totalorder %s136, %s137
      %p146 = scmp.eq.s32.totalorder %s17, 0
      %p147 = por %p145, %p146
      %p148 = scmp.ne.s32.totalorder %s136, %s137
      %p149 = scmp.eq.s32.totalorder %s18, 3
      %p150 = por %p148, %p149
      %p152 = scmp.ne.s32.totalorder %s137, %s151
      %p153 = scmp.eq.s32.totalorder %s18, 0
      %p154 = por %p152, %p153
      %s156 = sadd.s32 %s155, 1
      %p159 = scmp.eq.s32.totalorder %s12, 3
      %p160 = scmp.ne.s32.totalorder %s155, %s157
      %p161 = scmp.eq.s32.totalorder %s12, 0
      %p162 = por %p160, %p161
      %p163 = scmp.ne.s32.totalorder %s155, %s157
      %p164 = scmp.eq.s32.totalorder %s17, 3
      %p165 = por %p163, %p164
      %p166 = scmp.ne.s32.totalorder %s157, %s158
      %p167 = scmp.eq.s32.totalorder %s17, 0
      %p168 = por %p166, %p167
      %p169 = scmp.ne.s32.totalorder %s157, %s158
      %p170 = scmp.eq.s32.totalorder %s18, 3
      %p171 = por %p169, %p170
      %p173 = scmp.ne.s32.totalorder %s158, %s172
      %p174 = scmp.eq.s32.totalorder %s18, 0
      %p175 = por %p173, %p174
      %s176 = ssub.s32 %s19, %s31
      %s177 = ssub.s32 %s20, %s27
      %s178 = sor.u32 %s176, %s177
      %p179 = scmp.eq.s32.totalorder %s178, 0
      %s181 = sadd.s32 %s180, 1
      %s182 = scalar_select %p179, %s180, %s181
      %p185 = pneg %p179
      %p186 = scmp.eq.s32.totalorder %s12, 3
      %p187 = por %p185, %p186
      %p188 = scmp.ne.s32.totalorder %s180, %s183
      %p189 = scmp.eq.s32.totalorder %s12, 0
      %p190 = por %p188, %p189
      %p191 = scmp.ne.s32.totalorder %s180, %s183
      %p192 = scmp.eq.s32.totalorder %s17, 3
      %p193 = por %p191, %p192
      %p194 = scmp.ne.s32.totalorder %s183, %s184
      %p195 = scmp.eq.s32.totalorder %s17, 0
      %p196 = por %p194, %p195
      %p197 = scmp.ne.s32.totalorder %s183, %s184
      %p198 = scmp.eq.s32.totalorder %s18, 3
      %p199 = por %p197, %p198
      %p201 = scmp.ne.s32.totalorder %s184, %s200
      %p202 = scmp.eq.s32.totalorder %s18, 0
      %p203 = por %p201, %p202
      %p204 = scmp.le.s32.totalorder 1, %s12
      %p205 = scmp.lt.s32.totalorder %s12, 5
      %p206 = pnand %p204, %p205
      %p207 = pneg %p206
      // Predicated region
      $region9: #{rpn_head_single.1} parent=5 // pred_check
        _
      $region10: #{rpn_head_single.1} parent=5 // pred_check_branch
        %209 = sbr.rel (%p206) target = $region12
      $region11: #{rpn_head_single.1} parent=5 // pred_region
        %s210 = ssub.s32 %s12, 1
        // Predicated region
        $region13: #{rpn_head_single.1} parent=11 // pred_check
          %p211 = pneg %p105
        $region14: #{rpn_head_single.1} parent=11 // pred_check_branch
          %213 = sbr.rel (%p211) target = $region16
        $region15: #{rpn_head_single.1} parent=11 // pred_region
          _
        $region16: #{rpn_head_single.1} parent=11 // pred_fallthru
          _
        // Predicated region
        $region17: #{rpn_head_single.1} parent=11 // pred_check
          %p214 = pneg %p126
        $region18: #{rpn_head_single.1} parent=11 // pred_check_branch
          %216 = sbr.rel (%p214) target = $region20
        $region19: #{rpn_head_single.1} parent=11 // pred_region
          _
        $region20: #{rpn_head_single.1} parent=11 // pred_fallthru
          _
        // Predicated region
        $region21: #{rpn_head_single.1} parent=11 // pred_check
          %p217 = pneg %p147
        $region22: #{rpn_head_single.1} parent=11 // pred_check_branch
          %219 = sbr.rel (%p217) target = $region24
        $region23: #{rpn_head_single.1} parent=11 // pred_region
          _
        $region24: #{rpn_head_single.1} parent=11 // pred_fallthru
          _
        // Predicated region
        $region25: #{rpn_head_single.1} parent=11 // pred_check
          %p220 = pneg %p168
        $region26: #{rpn_head_single.1} parent=11 // pred_check_branch
          %222 = sbr.rel (%p220) target = $region28
        $region27: #{rpn_head_single.1} parent=11 // pred_region
          _
        $region28: #{rpn_head_single.1} parent=11 // pred_fallthru
          _
      $region12: #{rpn_head_single.1} parent=5 // pred_fallthru
        _
      %p223 = scmp.lt.s32.totalorder %s12, 4
      // Predicated region
      $region29: #{rpn_head_single.1} parent=5 // pred_check
        %p224 = pneg %p223
      $region30: #{rpn_head_single.1} parent=5 // pred_check_branch
        %226 = sbr.rel (%p224) target = $region32
      $region31: #{rpn_head_single.1} parent=5 // pred_region
        // Predicated region
        $region33: #{rpn_head_single.1} parent=31 // pred_check
          %p227 = pneg %p46
        $region34: #{rpn_head_single.1} parent=31 // pred_check_branch
          %229 = sbr.rel (%p227) target = $region36
        $region35: #{rpn_head_single.1} parent=31 // pred_region
          %s230 = smul.u32 8, %s20
          %s231 = ssub.s32 18, %s230
          %p232 = scmp.lt.s32.totalorder %s231, 8
          %s233 = scalar_select %p232, %s231, 8
          %s234 = smul.u32 4, %s233
          %s235 = smul.u32 %s234, 3
          %p236 = scmp.lt.s32.totalorder %s19, 1
          %s237 = scalar_select %p236, %s19, 1
          %p238 = scmp.lt.s32.totalorder %s230, 17
          %s239 = scalar_select %p238, %s230, 17
          %s240 = smul.addr %s239, 3
          %s241 = smul.addr %s237, 54
          %s242 = sadd.s32 %s240, %s241
          %s243 = smul.addr %s242, 4
          %s244 = scalar_lea.vmem %s0, %s243
          %s245 = smul.u32 8, %s20
          %s246 = ssub.s32 18, %s245
          %p247 = scmp.lt.s32.totalorder %s246, 8
          %s248 = scalar_select %p247, %s246, 8
          %s249 = smul.u32 4, %s248
          %s250 = smul.u32 %s249, 3
        $region36: #{rpn_head_single.1} parent=31 // pred_fallthru
          _
        // Predicated region
        $region37: #{rpn_head_single.1} parent=31 // pred_check
          %p251 = pneg %p78
        $region38: #{rpn_head_single.1} parent=31 // pred_check_branch
          %253 = sbr.rel (%p251) target = $region40
        $region39: #{rpn_head_single.1} parent=31 // pred_region
          %s254 = sadd.s32 %s20, 1
          %s255 = smul.u32 %s254, 4
          %s256 = smul.u32 2, %s255
          %p257 = scmp.lt.s32.totalorder %s19, 1
          %s258 = scalar_select %p257, %s19, 1
          %p259 = scmp.lt.s32.totalorder %s256, 17
          %s260 = scalar_select %p259, %s256, 17
          %s261 = smul.addr %s260, 3
          %s262 = smul.addr %s258, 54
          %s263 = sadd.s32 %s261, %s262
          %s264 = smul.addr %s263, 4
          %s265 = scalar_lea.vmem %s1, %s264
          %s266 = sadd.s32 %s20, 1
          %s267 = smul.u32 %s266, 4
          %s268 = smul.u32 2, %s267
        $region40: #{rpn_head_single.1} parent=31 // pred_fallthru
          _
      $region32: #{rpn_head_single.1} parent=5 // pred_fallthru
        _
      %p269 = scmp.le.s32.totalorder 1, %s12
      %p270 = scmp.lt.s32.totalorder %s12, 5
      %p271 = pnand %p269, %p270
      %p272 = pneg %p271
      // Predicated region
      $region41: #{rpn_head_single.1} parent=5 // pred_check
        _
      $region42: #{rpn_head_single.1} parent=5 // pred_check_branch
        %274 = sbr.rel (%p271) target = $region44
      $region43: #{rpn_head_single.1} parent=5 // pred_region
        %s275 = ssub.s32 %s12, 1
        %s276 = smul.u32 8, %s22
        %s277 = ssub.s32 18, %s276
        %p278 = scmp.lt.s32.totalorder %s277, 8
        %s279 = scalar_select %p278, %s277, 8
        %s280 = smul.u32 4, %s279
        %s281 = smul.u32 %s280, 3
        %p282 = scmp.lt.s32.totalorder %s21, 1
        %s283 = scalar_select %p282, %s21, 1
        %p284 = scmp.lt.s32.totalorder %s276, 17
        %s285 = scalar_select %p284, %s276, 17
        %s286 = smul.addr %s285, 3
        %s287 = smul.addr %s283, 54
        %s288 = sadd.s32 %s286, %s287
        %s289 = smul.addr %s288, 4
        %s290 = scalar_lea.vmem %s0, %s289
        %p291 = pneg %p52
        %p292 = pneg %p49
        %s293 = sadd.s32 %s22, 1
        %s294 = smul.u32 %s293, 4
        %s295 = smul.u32 2, %s294
        %p296 = scmp.lt.s32.totalorder %s21, 1
        %s297 = scalar_select %p296, %s21, 1
        %p298 = scmp.lt.s32.totalorder %s295, 17
        %s299 = scalar_select %p298, %s295, 17
        %s300 = smul.addr %s299, 3
        %s301 = smul.addr %s297, 54
        %s302 = sadd.s32 %s300, %s301
        %s303 = smul.addr %s302, 4
        %s304 = scalar_lea.vmem %s1, %s303
        %p305 = pneg %p84
        %p306 = pneg %p81
        %p307 = pneg %p105
        %p308 = pneg %p102
        %p309 = pneg %p126
        %p310 = pneg %p123
        %p311 = pneg %p147
        %p312 = pneg %p144
        %p313 = pneg %p168
        %p314 = pneg %p165
        %p315 = pneg %p196
        %p316 = pneg %p193
        %s317 = sand.u32 %s183, 1
        %s318 = sand.u32 %s183, 1
        %s319 = smul.addr %s318, 16
        %s320 = scalar_lea.vmem [#allocation2], %s319
        %s321 = smul.u32 8, %s22
        %s322 = ssub.s32 18, %s321
        %p323 = scmp.lt.s32.totalorder %s322, 8
        %s324 = scalar_select %p323, %s322, 8
        %s325 = smul.u32 4, %s324
        %s326 = smul.u32 %s325, 3
        %p327 = scmp.lt.s32.totalorder %s21, 1
        %s328 = scalar_select %p327, %s21, 1
        %p329 = scmp.lt.s32.totalorder %s321, 17
        %s330 = scalar_select %p329, %s321, 17
        %s331 = smul.addr %s330, 3
        %s332 = smul.addr %s328, 54
        %s333 = sadd.s32 %s331, %s332
        %s334 = smul.addr %s333, 4
        %s335 = scalar_lea.vmem %s0, %s334
        %s336 = smul.u32 8, %s22
        %s337 = ssub.s32 18, %s336
        %p338 = scmp.lt.s32.totalorder %s337, 8
        %s339 = scalar_select %p338, %s337, 8
        %s340 = smul.u32 4, %s339
        %s341 = smul.u32 %s340, 3
        %s342 = sadd.s32 %s22, 1
        %s343 = smul.u32 %s342, 4
        %s344 = smul.u32 2, %s343
        %p345 = scmp.lt.s32.totalorder %s21, 1
        %s346 = scalar_select %p345, %s21, 1
        %p347 = scmp.lt.s32.totalorder %s344, 17
        %s348 = scalar_select %p347, %s344, 17
        %s349 = smul.addr %s348, 3
        %s350 = smul.addr %s346, 54
        %s351 = sadd.s32 %s349, %s350
        %s352 = smul.addr %s351, 4
        %s353 = scalar_lea.vmem %s1, %s352
        %s354 = sadd.s32 %s22, 1
        %s355 = smul.u32 %s354, 4
        %s356 = smul.u32 2, %s355
        %v358 = vld [vmem:[%s335] sm:$0xf]
        %v359 = vld [vmem:[%s335 + $0x4] sm:$0xf]
        %v360 = vld [vmem:[%s335 + $0x8] sm:$0x1]
        %v361 = vld [vmem:[%s335 + $0xc] sm:$0xf]
        %v362 = vld [vmem:[%s335 + $0x10] sm:$0xf]
        %v363 = vld [vmem:[%s335 + $0x14] sm:$0x1]
        %v364 = vld [vmem:[%s335 + $0x18] sm:$0xf]
        %v365 = vld [vmem:[%s335 + $0x1c] sm:$0xf]
        %v366 = vld [vmem:[%s335 + $0x20] sm:$0x1]
        %v367 = vld [vmem:[%s335 + $0x24] sm:$0xf]
        %v368 = vld [vmem:[%s335 + $0x28] sm:$0xf]
        %v369 = vld [vmem:[%s335 + $0x2c] sm:$0x1]
        %v370 = vld [vmem:[%s335 + $0x30] sm:$0xf]
        %v371 = vld [vmem:[%s335 + $0x34] sm:$0xf]
        %v372 = vld [vmem:[%s335 + $0x38] sm:$0x1]
        %v373 = vld [vmem:[%s335 + $0x3c] sm:$0xf]
        %v374 = vld [vmem:[%s335 + $0x40] sm:$0xf]
        %v375 = vld [vmem:[%s335 + $0x44] sm:$0x1]
        %v376 = vld [vmem:[%s335 + $0x48] sm:$0xf]
        %v377 = vld [vmem:[%s335 + $0x4c] sm:$0xf]
        %v378 = vld [vmem:[%s335 + $0x50] sm:$0x1]
        %v379 = vld [vmem:[%s335 + $0x54] sm:$0xf]
        %v380 = vld [vmem:[%s335 + $0x58] sm:$0xf]
        %v381 = vld [vmem:[%s335 + $0x5c] sm:$0x1]
        %v394 = vunpack.c.l.b16 %v358
        %v395 = vunpack.c.l.b16 %v359
        %v396 = vunpack.c.l.b16 %v361
        %v397 = vunpack.c.l.b16 %v362
        %v398 = vunpack.c.l.b16 %v364
        %v399 = vunpack.c.l.b16 %v365
        %v400 = vunpack.c.l.b16 %v367
        %v401 = vunpack.c.l.b16 %v368
        %v402 = vunpack.c.l.b16 %v370
        %v403 = vunpack.c.l.b16 %v371
        %v404 = vunpack.c.l.b16 %v373
        %v405 = vunpack.c.l.b16 %v374
        %v406 = vpack.c.b16 %v395, %v394
        %v407 = vpack.c.b16 %v397, %v396
        %v408 = vpack.c.b16 %v399, %v398
        %v409 = vpack.c.b16 %v401, %v400
        %v410 = vpack.c.b16 %v403, %v402
        %v411 = vpack.c.b16 %v405, %v404
        %v418 = vunpack.c.l.b16 %v360
        %v419 = vunpack.c.l.b16 %v363
        %v420 = vunpack.c.l.b16 %v366
        %v421 = vunpack.c.l.b16 %v369
        %v422 = vunpack.c.l.b16 %v372
        %v423 = vunpack.c.l.b16 %v375
        %v424 = vpack.c.b16 %v418, %v418
        %v425 = vpack.c.b16 %v419, %v419
        %v426 = vpack.c.b16 %v420, %v420
        %v427 = vpack.c.b16 %v421, %v421
        %v428 = vpack.c.b16 %v422, %v422
        %v429 = vpack.c.b16 %v423, %v423
        %vm430 = vsmask.f32 7424
        %v432 = vshrl.u32 %v406, 16
        %v434 = vshll.u32 %v406, 16
        %v436 = vrot.slane %v434, 1
        %v437 = vor.u32 %v432, %v436
        %v439 = vshll.u32 %v424, 16
        %v441 = vrot.slane %v439, 1
        %v442 = vsel %vm430, %v437, %v441
        %v444 = vshrl.u32 %v407, 16
        %v446 = vshll.u32 %v407, 16
        %v448 = vrot.slane %v446, 1
        %v449 = vor.u32 %v444, %v448
        %v451 = vshll.u32 %v425, 16
        %v453 = vrot.slane %v451, 1
        %v454 = vsel %vm430, %v449, %v453
        %v456 = vshrl.u32 %v408, 16
        %v458 = vshll.u32 %v408, 16
        %v460 = vrot.slane %v458, 1
        %v461 = vor.u32 %v456, %v460
        %v463 = vshll.u32 %v426, 16
        %v465 = vrot.slane %v463, 1
        %v466 = vsel %vm430, %v461, %v465
        %v468 = vshrl.u32 %v409, 16
        %v470 = vshll.u32 %v409, 16
        %v472 = vrot.slane %v470, 1
        %v473 = vor.u32 %v468, %v472
        %v475 = vshll.u32 %v427, 16
        %v477 = vrot.slane %v475, 1
        %v478 = vsel %vm430, %v473, %v477
        %v480 = vshrl.u32 %v410, 16
        %v482 = vshll.u32 %v410, 16
        %v484 = vrot.slane %v482, 1
        %v485 = vor.u32 %v480, %v484
        %v487 = vshll.u32 %v428, 16
        %v489 = vrot.slane %v487, 1
        %v490 = vsel %vm430, %v485, %v489
        %v492 = vshrl.u32 %v411, 16
        %v494 = vshll.u32 %v411, 16
        %v496 = vrot.slane %v494, 1
        %v497 = vor.u32 %v492, %v496
        %v499 = vshll.u32 %v429, 16
        %v501 = vrot.slane %v499, 1
        %v502 = vsel %vm430, %v497, %v501
        %503 = vrot.lane.b32.xlu0 %v442, 4
        %v504 = vpop.permute.xlu0 %503
        %505 = vrot.lane.b32.xlu0 %v454, 4
        %v506 = vpop.permute.xlu0 %505
        %507 = vrot.lane.b32.xlu0 %v466, 4
        %v508 = vpop.permute.xlu0 %507
        %509 = vrot.lane.b32.xlu0 %v478, 4
        %v510 = vpop.permute.xlu0 %509
        %511 = vrot.lane.b32.xlu0 %v490, 4
        %v512 = vpop.permute.xlu0 %511
        %513 = vrot.lane.b32.xlu0 %v502, 4
        %v514 = vpop.permute.xlu0 %513
        %vm515 = vcmask 1046528
        %v516 = vrot.slane %v406, 1
        %v517 = vrot.slane %v424, 1
        %v518 = vsel %vm515, %v516, %v517
        %v519 = vrot.slane %v407, 1
        %v520 = vrot.slane %v425, 1
        %v521 = vsel %vm515, %v519, %v520
        %v522 = vrot.slane %v408, 1
        %v523 = vrot.slane %v426, 1
        %v524 = vsel %vm515, %v522, %v523
        %v525 = vrot.slane %v409, 1
        %v526 = vrot.slane %v427, 1
        %v527 = vsel %vm515, %v525, %v526
        %v528 = vrot.slane %v410, 1
        %v529 = vrot.slane %v428, 1
        %v530 = vsel %vm515, %v528, %v529
        %v531 = vrot.slane %v411, 1
        %v532 = vrot.slane %v429, 1
        %v533 = vsel %vm515, %v531, %v532
        %534 = vrot.lane.b32.xlu0 %v518, 8
        %v535 = vpop.permute.xlu0 %534
        %536 = vrot.lane.b32.xlu0 %v521, 8
        %v537 = vpop.permute.xlu0 %536
        %538 = vrot.lane.b32.xlu0 %v524, 8
        %v539 = vpop.permute.xlu0 %538
        %540 = vrot.lane.b32.xlu0 %v527, 8
        %v541 = vpop.permute.xlu0 %540
        %542 = vrot.lane.b32.xlu0 %v530, 8
        %v543 = vpop.permute.xlu0 %542
        %544 = vrot.lane.b32.xlu0 %v533, 8
        %v545 = vpop.permute.xlu0 %544
        %vm546 = vcmask 31744
        %v548 = vsel %vm546, %v406, %v504
        %v550 = vsel %vm546, %v407, %v506
        %v552 = vsel %vm546, %v408, %v508
        %v554 = vsel %vm546, %v409, %v510
        %v556 = vsel %vm546, %v410, %v512
        %v558 = vsel %vm546, %v411, %v514
        %vm559 = vcmask 64512
        %v561 = vsel %vm559, %v548, %v535
        %v563 = vsel %vm559, %v550, %v537
        %v565 = vsel %vm559, %v552, %v539
        %v567 = vsel %vm559, %v554, %v541
        %v569 = vsel %vm559, %v556, %v543
        %v571 = vsel %vm559, %v558, %v545
        %v572 = vld [vmem:[%s2] sm:$0xf]
        %v573 = vld [vmem:[%s2 + $0x4] sm:$0x3]
        %v576 = vunpack.c.l.b16 %v376
        %v577 = vunpack.c.l.b16 %v377
        %v578 = vpack.c.b16 %v577, %v576
        %v580 = vunpack.c.l.b16 %v378
        %v581 = vpack.c.b16 %v580, %v580
        %v583 = vshrl.u32 %v578, 16
        %v585 = vshll.u32 %v578, 16
        %v587 = vrot.slane %v585, 1
        %v588 = vor.u32 %v583, %v587
        %v590 = vshll.u32 %v581, 16
        %v592 = vrot.slane %v590, 1
        %v593 = vsel %vm430, %v588, %v592
        %594 = vrot.lane.b32.xlu0 %v593, 4
        %v595 = vpop.permute.xlu0 %594
        %v596 = vrot.slane %v578, 1
        %v597 = vrot.slane %v581, 1
        %v598 = vsel %vm515, %v596, %v597
        %599 = vrot.lane.b32.xlu0 %v598, 8
        %v600 = vpop.permute.xlu0 %599
        %v602 = vsel %vm546, %v578, %v595
        %v604 = vsel %vm559, %v602, %v600
        %s605 = scalar_lea.vmem %s2, 8
        %v606 = vld [vmem:[%s605] sm:$0xf]
        %v607 = vld [vmem:[%s605 + $0x4] sm:$0x3]
        %v610 = vunpack.c.l.b16 %v606
        %v611 = vunpack.c.l.b16 %v607
        %v612 = vpack.c.b16 %v611, %v610
        %vm613 = vcmask 97280
        %v614 = vsel %vm613, %v563, 0
        %v616 = vsel %vm613, %v565, 0
        %v618 = vsel %vm613, %v567, 0
        %v620 = vsel %vm613, %v569, 0
        %v622 = vsel %vm613, %v571, 0
        %v624 = vsel %vm613, %v604, 0
        %vm626 = vcmask 1045504
        %v628 = vsel %vm626, %v612, 0
        %630 = vmatpush.bf16.msra.mxu0 0
        %631 = vmatpush.bf16.msra.mxu0 0
        %632 = vmatpush.bf16.msra.mxu0 0
        %633 = vmatpush.bf16.msra.mxu0 0
        %634 = vmatpush.bf16.msra.mxu0 0
        %635 = vmatpush.bf16.msra.mxu0 0
        %636 = vmatpush.bf16.msra.mxu0 0
        %637 = vmatpush.bf16.msra.mxu0 %v628
        %638 = vmatmul.bf16.gmra.mxu0 %v614
        %v639 = vpop.f32.mrf.mxu0
        %v640 = vadd.f32 0.0, %v639
        %v641 = vpop.f32.mrf.mxu0
        %v642 = vadd.f32 0.0, %v641
        %643 = vmatmul.bf16.gmra.mxu0 %v616
        %v644 = vpop.f32.mrf.mxu0
        %v645 = vadd.f32 0.0, %v644
        %v646 = vpop.f32.mrf.mxu0
        %v647 = vadd.f32 0.0, %v646
        %648 = vmatmul.bf16.gmra.mxu0 %v618
        %v649 = vpop.f32.mrf.mxu0
        %v650 = vadd.f32 0.0, %v649
        %v651 = vpop.f32.mrf.mxu0
        %v652 = vadd.f32 0.0, %v651
        %653 = vmatmul.bf16.gmra.mxu0 %v620
        %v654 = vpop.f32.mrf.mxu0
        %v655 = vadd.f32 0.0, %v654
        %v656 = vpop.f32.mrf.mxu0
        %v657 = vadd.f32 0.0, %v656
        %658 = vmatmul.bf16.gmra.mxu0 %v622
        %v659 = vpop.f32.mrf.mxu0
        %v660 = vadd.f32 0.0, %v659
        %v661 = vpop.f32.mrf.mxu0
        %v662 = vadd.f32 0.0, %v661
        %663 = vmatmul.bf16.gmra.mxu0 %v624
        %v664 = vpop.f32.mrf.mxu0
        %v665 = vadd.f32 0.0, %v664
        %v666 = vpop.f32.mrf.mxu0
        %v667 = vadd.f32 0.0, %v666
        %668 = vdwg.mxu0
        %v671 = vunpack.c.l.b16 %v572
        %v672 = vunpack.c.l.b16 %v573
        %v673 = vpack.c.b16 %v672, %v671
        %v674 = vsel %vm613, %v561, 0
        %v677 = vsel %vm626, %v673, 0
        %679 = vmatpush.bf16.msra.mxu0 0
        %680 = vmatpush.bf16.msra.mxu0 0
        %681 = vmatpush.bf16.msra.mxu0 0
        %682 = vmatpush.bf16.msra.mxu0 0
        %683 = vmatpush.bf16.msra.mxu0 0
        %684 = vmatpush.bf16.msra.mxu0 0
        %685 = vmatpush.bf16.msra.mxu0 0
        %686 = vmatpush.bf16.msra.mxu0 %v677
        %687 = vmatmul.bf16.gmra.mxu0 %v674
        %v688 = vpop.f32.mrf.mxu0
        %v689 = vadd.f32 %v640, %v688
        %v690 = vpop.f32.mrf.mxu0
        %v691 = vadd.f32 %v642, %v690
        %692 = vmatmul.bf16.gmra.mxu0 %v614
        %v693 = vpop.f32.mrf.mxu0
        %v694 = vadd.f32 %v645, %v693
        %v695 = vpop.f32.mrf.mxu0
        %v696 = vadd.f32 %v647, %v695
        %697 = vmatmul.bf16.gmra.mxu0 %v616
        %v698 = vpop.f32.mrf.mxu0
        %v699 = vadd.f32 %v650, %v698
        %v700 = vpop.f32.mrf.mxu0
        %v701 = vadd.f32 %v652, %v700
        %702 = vmatmul.bf16.gmra.mxu0 %v618
        %v703 = vpop.f32.mrf.mxu0
        %v704 = vadd.f32 %v655, %v703
        %v705 = vpop.f32.mrf.mxu0
        %v706 = vadd.f32 %v657, %v705
        %707 = vmatmul.bf16.gmra.mxu0 %v620
        %v708 = vpop.f32.mrf.mxu0
        %v709 = vadd.f32 %v660, %v708
        %v710 = vpop.f32.mrf.mxu0
        %v711 = vadd.f32 %v662, %v710
        %712 = vmatmul.bf16.gmra.mxu0 %v622
        %v713 = vpop.f32.mrf.mxu0
        %v714 = vadd.f32 %v665, %v713
        %v715 = vpop.f32.mrf.mxu0
        %v716 = vadd.f32 %v667, %v715
        %717 = vdwg.mxu0
        %v720 = vunpack.c.l.b16 %v379
        %v721 = vunpack.c.l.b16 %v380
        %v722 = vpack.c.b16 %v721, %v720
        %v724 = vunpack.c.l.b16 %v381
        %v725 = vpack.c.b16 %v724, %v724
        %v727 = vshrl.u32 %v722, 16
        %v729 = vshll.u32 %v722, 16
        %v731 = vrot.slane %v729, 1
        %v732 = vor.u32 %v727, %v731
        %v734 = vshll.u32 %v725, 16
        %v736 = vrot.slane %v734, 1
        %v737 = vsel %vm430, %v732, %v736
        %738 = vrot.lane.b32.xlu0 %v737, 4
        %v739 = vpop.permute.xlu0 %738
        %v740 = vrot.slane %v722, 1
        %v741 = vrot.slane %v725, 1
        %v742 = vsel %vm515, %v740, %v741
        %743 = vrot.lane.b32.xlu0 %v742, 8
        %v744 = vpop.permute.xlu0 %743
        %v746 = vsel %vm546, %v722, %v739
        %v748 = vsel %vm559, %v746, %v744
        %s749 = scalar_lea.vmem %s2, 16
        %v750 = vld [vmem:[%s749] sm:$0xf]
        %v751 = vld [vmem:[%s749 + $0x4] sm:$0x3]
        %v754 = vunpack.c.l.b16 %v750
        %v755 = vunpack.c.l.b16 %v751
        %v756 = vpack.c.b16 %v755, %v754
        %v757 = vsel %vm613, %v748, 0
        %v760 = vsel %vm626, %v756, 0
        %762 = vmatpush.bf16.msra.mxu0 0
        %763 = vmatpush.bf16.msra.mxu0 0
        %764 = vmatpush.bf16.msra.mxu0 0
        %765 = vmatpush.bf16.msra.mxu0 0
        %766 = vmatpush.bf16.msra.mxu0 0
        %767 = vmatpush.bf16.msra.mxu0 0
        %768 = vmatpush.bf16.msra.mxu0 0
        %769 = vmatpush.bf16.msra.mxu0 %v760
        %770 = vmatmul.bf16.gmra.mxu0 %v616
        %v771 = vpop.f32.mrf.mxu0
        %v772 = vadd.f32 0.0, %v771
        %v773 = vpop.f32.mrf.mxu0
        %v774 = vadd.f32 0.0, %v773
        %775 = vmatmul.bf16.gmra.mxu0 %v618
        %v776 = vpop.f32.mrf.mxu0
        %v777 = vadd.f32 0.0, %v776
        %v778 = vpop.f32.mrf.mxu0
        %v779 = vadd.f32 0.0, %v778
        %780 = vmatmul.bf16.gmra.mxu0 %v620
        %v781 = vpop.f32.mrf.mxu0
        %v782 = vadd.f32 0.0, %v781
        %v783 = vpop.f32.mrf.mxu0
        %v784 = vadd.f32 0.0, %v783
        %785 = vmatmul.bf16.gmra.mxu0 %v622
        %v786 = vpop.f32.mrf.mxu0
        %v787 = vadd.f32 0.0, %v786
        %v788 = vpop.f32.mrf.mxu0
        %v789 = vadd.f32 0.0, %v788
        %790 = vmatmul.bf16.gmra.mxu0 %v624
        %v791 = vpop.f32.mrf.mxu0
        %v792 = vadd.f32 0.0, %v791
        %v793 = vpop.f32.mrf.mxu0
        %v794 = vadd.f32 0.0, %v793
        %795 = vmatmul.bf16.gmra.mxu0 %v757
        %v796 = vpop.f32.mrf.mxu0
        %v797 = vadd.f32 0.0, %v796
        %v798 = vpop.f32.mrf.mxu0
        %v799 = vadd.f32 0.0, %v798
        %800 = vdwg.mxu0
        %v801 = vadd.f32 %v689, %v772
        %v802 = vadd.f32 %v691, %v774
        %v803 = vadd.f32 %v694, %v777
        %v804 = vadd.f32 %v696, %v779
        %v805 = vadd.f32 %v699, %v782
        %v806 = vadd.f32 %v701, %v784
        %v807 = vadd.f32 %v704, %v787
        %v808 = vadd.f32 %v706, %v789
        %v809 = vadd.f32 %v709, %v792
        %v810 = vadd.f32 %v711, %v794
        %v811 = vadd.f32 %v714, %v797
        %v812 = vadd.f32 %v716, %v799
        %v813 = vld [vmem:[%s3] sm:$0x1]
        %v815 = vperm.slane %v813, 0
        %v817 = vadd.f32 %v801, %v815
        %v818 = vadd.f32 %v802, %v815
        %v819 = vadd.f32 %v803, %v815
        %v820 = vadd.f32 %v804, %v815
        %v821 = vadd.f32 %v805, %v815
        %v822 = vadd.f32 %v806, %v815
        %v823 = vadd.f32 %v807, %v815
        %v824 = vadd.f32 %v808, %v815
        %v825 = vadd.f32 %v809, %v815
        %v826 = vadd.f32 %v810, %v815
        %v827 = vadd.f32 %v811, %v815
        %v828 = vadd.f32 %v812, %v815
        %v829 = vmax.f32 %v817, 0.0
        %v830 = vmax.f32 %v818, 0.0
        %v831 = vmax.f32 %v819, 0.0
        %v832 = vmax.f32 %v820, 0.0
        %v833 = vmax.f32 %v821, 0.0
        %v834 = vmax.f32 %v822, 0.0
        %v835 = vmax.f32 %v823, 0.0
        %v836 = vmax.f32 %v824, 0.0
        %v837 = vmax.f32 %v825, 0.0
        %v838 = vmax.f32 %v826, 0.0
        %v839 = vmax.f32 %v827, 0.0
        %v840 = vmax.f32 %v828, 0.0
        %v841 = vld [vmem:[%s4] sm:$0xf]
        %v842 = vld [vmem:[%s4 + $0x4] sm:$0xf]
        %v843 = vpack.c.bf16 %v830, %v829
        %v844 = vpack.c.bf16 %v832, %v831
        %v845 = vpack.c.bf16 %v834, %v833
        %v846 = vpack.c.bf16 %v836, %v835
        %v847 = vpack.c.bf16 %v838, %v837
        %v848 = vpack.c.bf16 %v840, %v839
        %v851 = vunpack.c.l.b16 %v841
        %v852 = vunpack.c.l.b16 %v842
        %v853 = vpack.c.b16 %v852, %v851
        %v855 = vsel %vm546, %v853, 0
        %v858 = vsel %vm546, %v843, 0
        %v861 = vsel %vm546, %v844, 0
        %v864 = vsel %vm546, %v845, 0
        %v867 = vsel %vm546, %v846, 0
        %v870 = vsel %vm546, %v847, 0
        %v873 = vsel %vm546, %v848, 0
        %875 = vmatpush.bf16.xpose.msra.mxu0 0
        %876 = vmatpush.bf16.xpose.msra.mxu0 0
        %877 = vmatpush.bf16.xpose.msra.mxu0 %v873
        %878 = vmatpush.bf16.xpose.msra.mxu0 %v870
        %879 = vmatpush.bf16.xpose.msra.mxu0 %v867
        %880 = vmatpush.bf16.xpose.msra.mxu0 %v864
        %881 = vmatpush.bf16.xpose.msra.mxu0 %v861
        %882 = vmatpush.bf16.xpose.msra.mxu0 %v858
        %883 = vmatmul.bf16.gmra.mxu0 %v855
        %v884 = vpop.f32.mrf.mxu0
        %v885 = vadd.f32 0.0, %v884
        %v886 = vpop.f32.mrf.mxu0
        %v887 = vadd.f32 0.0, %v886
        %888 = vdwg.mxu0
        %v889 = vld [vmem:[%s353] sm:$0xf]
        %v890 = vld [vmem:[%s353 + $0x4] sm:$0xf]
        %v891 = vld [vmem:[%s353 + $0x8] sm:$0x1]
        %v892 = vld [vmem:[%s353 + $0xc] sm:$0xf]
        %v893 = vld [vmem:[%s353 + $0x10] sm:$0xf]
        %v894 = vld [vmem:[%s353 + $0x14] sm:$0x1]
        %v897 = vunpack.c.l.b16 %v889
        %v898 = vunpack.c.l.b16 %v890
        %v899 = vpack.c.b16 %v898, %v897
        %v901 = vunpack.c.l.b16 %v891
        %v902 = vpack.c.b16 %v901, %v901
        %v904 = vshrl.u32 %v899, 16
        %v906 = vshll.u32 %v899, 16
        %v908 = vrot.slane %v906, 1
        %v909 = vor.u32 %v904, %v908
        %v911 = vshll.u32 %v902, 16
        %v913 = vrot.slane %v911, 1
        %v914 = vsel %vm430, %v909, %v913
        %915 = vrot.lane.b32.xlu0 %v914, 4
        %v916 = vpop.permute.xlu0 %915
        %v917 = vrot.slane %v899, 1
        %v918 = vrot.slane %v902, 1
        %v919 = vsel %vm515, %v917, %v918
        %920 = vrot.lane.b32.xlu0 %v919, 8
        %v921 = vpop.permute.xlu0 %920
        %v923 = vsel %vm546, %v899, %v916
        %v925 = vsel %vm559, %v923, %v921
        %v926 = vsel %vm613, %v925, 0
        %928 = vmatpush.bf16.msra.mxu0 0
        %929 = vmatpush.bf16.msra.mxu0 0
        %930 = vmatpush.bf16.msra.mxu0 0
        %931 = vmatpush.bf16.msra.mxu0 0
        %932 = vmatpush.bf16.msra.mxu0 0
        %933 = vmatpush.bf16.msra.mxu0 0
        %934 = vmatpush.bf16.msra.mxu0 0
        %935 = vmatpush.bf16.msra.mxu0 %v628
        %936 = vmatmul.bf16.gmra.mxu0 %v757
        %v937 = vpop.f32.mrf.mxu0
        %v938 = vadd.f32 0.0, %v937
        %v939 = vpop.f32.mrf.mxu0
        %v940 = vadd.f32 0.0, %v939
        %941 = vmatmul.bf16.gmra.mxu0 %v926
        %v942 = vpop.f32.mrf.mxu0
        %v943 = vadd.f32 0.0, %v942
        %v944 = vpop.f32.mrf.mxu0
        %v945 = vadd.f32 0.0, %v944
        %946 = vdwg.mxu0
        %947 = vmatpush.bf16.msra.mxu0 0
        %948 = vmatpush.bf16.msra.mxu0 0
        %949 = vmatpush.bf16.msra.mxu0 0
        %950 = vmatpush.bf16.msra.mxu0 0
        %951 = vmatpush.bf16.msra.mxu0 0
        %952 = vmatpush.bf16.msra.mxu0 0
        %953 = vmatpush.bf16.msra.mxu0 0
        %954 = vmatpush.bf16.msra.mxu0 %v677
        %955 = vmatmul.bf16.gmra.mxu0 %v624
        %v956 = vpop.f32.mrf.mxu0
        %v957 = vadd.f32 %v938, %v956
        %v958 = vpop.f32.mrf.mxu0
        %v959 = vadd.f32 %v940, %v958
        %960 = vmatmul.bf16.gmra.mxu0 %v757
        %v961 = vpop.f32.mrf.mxu0
        %v962 = vadd.f32 %v943, %v961
        %v963 = vpop.f32.mrf.mxu0
        %v964 = vadd.f32 %v945, %v963
        %965 = vdwg.mxu0
        %v968 = vunpack.c.l.b16 %v892
        %v969 = vunpack.c.l.b16 %v893
        %v970 = vpack.c.b16 %v969, %v968
        %v972 = vunpack.c.l.b16 %v894
        %v973 = vpack.c.b16 %v972, %v972
        %v975 = vshrl.u32 %v970, 16
        %v977 = vshll.u32 %v970, 16
        %v979 = vrot.slane %v977, 1
        %v980 = vor.u32 %v975, %v979
        %v982 = vshll.u32 %v973, 16
        %v984 = vrot.slane %v982, 1
        %v985 = vsel %vm430, %v980, %v984
        %986 = vrot.lane.b32.xlu0 %v985, 4
        %v987 = vpop.permute.xlu0 %986
        %v988 = vrot.slane %v970, 1
        %v989 = vrot.slane %v973, 1
        %v990 = vsel %vm515, %v988, %v989
        %991 = vrot.lane.b32.xlu0 %v990, 8
        %v992 = vpop.permute.xlu0 %991
        %v994 = vsel %vm546, %v970, %v987
        %v996 = vsel %vm559, %v994, %v992
        %v997 = vsel %vm613, %v996, 0
        %999 = vmatpush.bf16.msra.mxu0 0
        %1000 = vmatpush.bf16.msra.mxu0 0
        %1001 = vmatpush.bf16.msra.mxu0 0
        %1002 = vmatpush.bf16.msra.mxu0 0
        %1003 = vmatpush.bf16.msra.mxu0 0
        %1004 = vmatpush.bf16.msra.mxu0 0
        %1005 = vmatpush.bf16.msra.mxu0 0
        %1006 = vmatpush.bf16.msra.mxu0 %v760
        %1007 = vmatmul.bf16.gmra.mxu0 %v926
        %v1008 = vpop.f32.mrf.mxu0
        %v1009 = vadd.f32 0.0, %v1008
        %v1010 = vpop.f32.mrf.mxu0
        %v1011 = vadd.f32 0.0, %v1010
        %1012 = vmatmul.bf16.gmra.mxu0 %v997
        %v1013 = vpop.f32.mrf.mxu0
        %v1014 = vadd.f32 0.0, %v1013
        %v1015 = vpop.f32.mrf.mxu0
        %v1016 = vadd.f32 0.0, %v1015
        %1017 = vdwg.mxu0
        %v1018 = vadd.f32 %v957, %v1009
        %v1019 = vadd.f32 %v959, %v1011
        %v1020 = vadd.f32 %v962, %v1014
        %v1021 = vadd.f32 %v964, %v1016
        %v1022 = vadd.f32 %v1018, %v815
        %v1023 = vadd.f32 %v1019, %v815
        %v1024 = vadd.f32 %v1020, %v815
        %v1025 = vadd.f32 %v1021, %v815
        %v1026 = vmax.f32 %v1022, 0.0
        %v1027 = vmax.f32 %v1023, 0.0
        %v1028 = vmax.f32 %v1024, 0.0
        %v1029 = vmax.f32 %v1025, 0.0
        %v1030 = vpack.c.bf16 %v1027, %v1026
        %v1031 = vpack.c.bf16 %v1029, %v1028
        %v1033 = vsel %vm546, %v1030, 0
        %v1036 = vsel %vm546, %v1031, 0
        %1038 = vmatpush.bf16.xpose.msra.mxu0 0
        %1039 = vmatpush.bf16.xpose.msra.mxu0 0
        %1040 = vmatpush.bf16.xpose.msra.mxu0 0
        %1041 = vmatpush.bf16.xpose.msra.mxu0 0
        %1042 = vmatpush.bf16.xpose.msra.mxu0 0
        %1043 = vmatpush.bf16.xpose.msra.mxu0 0
        %1044 = vmatpush.bf16.xpose.msra.mxu0 %v1036
        %1045 = vmatpush.bf16.xpose.msra.mxu0 %v1033
        %1046 = vmatmul.bf16.gmra.mxu0 %v855
        %v1047 = vpop.f32.mrf.mxu0
        %v1048 = vadd.f32 0.0, %v1047
        %v1049 = vpop.f32.mrf.mxu0
        %v1050 = vadd.f32 0.0, %v1049
        %1051 = vdwg.mxu0
        %1054 = vrot.lane.b32.xlu0 %v1048, 96
        %v1055 = vpop.permute.xlu0 %1054
        %1056 = vrot.lane.b32.xlu0 %v1050, 96
        %v1057 = vpop.permute.xlu0 %1056
        %vm1060 = vcmask 785408
        %v1061 = vsel %vm1060, %v885, %v1055
        %v1062 = vsel %vm1060, %v887, %v1057
        %v1063 = vld [vmem:[%s5] sm:$0xff]
        %v1064 = vld [vmem:[%s5 + $0x8] sm:$0x7f]
        %1066 = vset.pattern.permute.xlu0 0
        %1067 = vperm.xlu0 %1066, %v1063
        %v1068 = vpop.permute.xlu0 %1067
        %1071 = vset.pattern.permute.xlu0 0
        %1072 = vperm.xlu0 %1071, %v1064
        %v1073 = vpop.permute.xlu0 %1072
        %v1075 = vadd.f32 %v1061, %v1068
        %v1076 = vadd.f32 %v1062, %v1073
        %1077 = vst [vmem:[%s320] sm:$0xff] %v1075
        %1078 = vst [vmem:[%s320 + $0x8] sm:$0x7f] %v1076
        %s1079 = sand.u32 %s183, 1
        %s1080 = sand.u32 %s183, 1
        %s1081 = smul.addr %s1080, 16
        %s1082 = scalar_lea.vmem [#allocation2], %s1081
        // Predicated region
        $region45: #{rpn_head_single.1} parent=43 // pred_check
          %p1083 = pneg %p193
        $region46: #{rpn_head_single.1} parent=43 // pred_check_branch
          %1085 = sbr.rel (%p1083) target = $region48
        $region47: #{rpn_head_single.1} parent=43 // pred_region
          %s1086 = smul.addr %s21, 4
          %s1087 = sadd.s32 %s22, %s1086
          %s1088 = smul.addr %s1087, 8
          %s1089 = scalar_lea.vmem %s6, %s1088
          // Predicated region
          $region49: #{rpn_head_single.1} parent=47 // pred_check
            _
          $region50: #{rpn_head_single.1} parent=47 // pred_check_branch
            %1091 = sbr.rel (0) target = $region52
          $region51: #{rpn_head_single.1} parent=47 // pred_region
            // Predicated region
            $region53: #{rpn_head_single.1} parent=51 // pred_check
              _
            $region54: #{rpn_head_single.1} parent=51 // pred_check_branch
              %1093 = sbr.rel (0) target = $region56
            $region55: #{rpn_head_single.1} parent=51 // pred_region
              // Predicated region
              $region68: #{rpn_head_single.1} parent=55 // pred_check
                _
              $region69: #{rpn_head_single.1} parent=55 // pred_check_branch
                %1111 = sbr.rel (0) target = $region71
              $region70: #{rpn_head_single.1} parent=55 // pred_region
                loop: start=0, step=1, limit=1
                $region72: #{rpn_head_single.1} parent=70 // loop_pre_header
                  _
                $region73: #{rpn_head_single.1} parent=70 // loop_header
                  %s1113 = sphi 0, %s1117
                  %p1114 = scmp.ge.s32.totalorder %s1113, 1
                  %s1118 = sphi %s1082, %s1082
                  %s1119 = sphi %s1089, %s1089
                $region74: #{rpn_head_single.1} parent=70 // loop_header_branch
                  %1116 = sbr.rel (%p1114) target = $region78
                $region75: #{rpn_head_single.1} parent=70 // loop_body
                  %v1120 = vld [vmem:[%s1118] sm:$0xff]
                  %1121 = vst [vmem:[%s1119] sm:$0xff] %v1120
                  %v1122 = vld [vmem:[%s1118 + $0x8] sm:$0xff]
                  %1123 = vst [vmem:[%s1119 + $0x10] sm:$0xff] %v1122
                $region76: #{rpn_head_single.1} parent=70 // loop_footer
                  %s1117 = sadd.s32 1, %s1113
                $region77: #{rpn_head_single.1} parent=70 // loop_footer_branch
                  %1112 = sbr.rel target = $region73
                $region78: #{rpn_head_single.1} parent=70 // loop_exit
                  _
              $region71: #{rpn_head_single.1} parent=55 // pred_fallthru
                _
              // Predicated region
              $region79: #{rpn_head_single.1} parent=55 // pred_check
                _
              $region80: #{rpn_head_single.1} parent=55 // pred_check_branch
                %1125 = sbr.rel target = $region82
              $region81: #{rpn_head_single.1} parent=55 // pred_region
                _
              $region82: #{rpn_head_single.1} parent=55 // pred_fallthru
                _
            $region56: #{rpn_head_single.1} parent=51 // pred_fallthru
              _
            // Predicated region
            $region57: #{rpn_head_single.1} parent=51 // pred_check
              _
            $region58: #{rpn_head_single.1} parent=51 // pred_check_branch
              %1095 = sbr.rel target = $region60
            $region59: #{rpn_head_single.1} parent=51 // pred_region
              %s1097 = ssub.s32 256, 1
              loop: start=0, step=1, limit=1
              $region61: #{rpn_head_single.1} parent=59 // loop_pre_header
                _
              $region62: #{rpn_head_single.1} parent=59 // loop_header
                %s1099 = sphi 0, %s1103
                %p1100 = scmp.ge.s32.totalorder %s1099, 1
                %s1104 = sphi %s1082, %s1082
                %s1105 = sphi %s1089, %s1089
              $region63: #{rpn_head_single.1} parent=59 // loop_header_branch
                %1102 = sbr.rel (%p1100) target = $region67
              $region64: #{rpn_head_single.1} parent=59 // loop_body
                %v1106 = vld [vmem:[%s1104] sm:%s1097]
                %1107 = vst [vmem:[%s1105] sm:%s1097] %v1106
                %v1108 = vld [vmem:[%s1104 + $0x8] sm:%s1097]
                %1109 = vst [vmem:[%s1105 + $0x10] sm:%s1097] %v1108
              $region65: #{rpn_head_single.1} parent=59 // loop_footer
                %s1103 = sadd.s32 1, %s1099
              $region66: #{rpn_head_single.1} parent=59 // loop_footer_branch
                %1098 = sbr.rel target = $region62
              $region67: #{rpn_head_single.1} parent=59 // loop_exit
                _
            $region60: #{rpn_head_single.1} parent=51 // pred_fallthru
              _
          $region52: #{rpn_head_single.1} parent=47 // pred_fallthru
            _
          %1126 = vnop
        $region48: #{rpn_head_single.1} parent=43 // pred_fallthru
          _
      $region44: #{rpn_head_single.1} parent=5 // pred_fallthru
        _
      %p1127 = scmp.le.s32.totalorder 2, %s12
      // Predicated region
      $region83: #{rpn_head_single.1} parent=5 // pred_check
        %p1128 = pneg %p1127
      $region84: #{rpn_head_single.1} parent=5 // pred_check_branch
        %1130 = sbr.rel (%p1128) target = $region86
      $region85: #{rpn_head_single.1} parent=5 // pred_region
        %s1131 = ssub.s32 %s12, 2
        // Predicated region
        $region87: #{rpn_head_single.1} parent=85 // pred_check
          %p1132 = pneg %p199
        $region88: #{rpn_head_single.1} parent=85 // pred_check_branch
          %1134 = sbr.rel (%p1132) target = $region90
        $region89: #{rpn_head_single.1} parent=85 // pred_region
          %s1135 = sand.u32 %s184, 1
          %s1136 = sand.u32 %s184, 1
          %s1137 = smul.addr %s1136, 16
          %s1138 = scalar_lea.vmem [#allocation2], %s1137
        $region90: #{rpn_head_single.1} parent=85 // pred_fallthru
          _
      $region86: #{rpn_head_single.1} parent=5 // pred_fallthru
        _
    $region6: #{rpn_head_single.1} parent=1 // loop_footer
      %s16 = sadd.s32 1, %s12
    $region7: #{rpn_head_single.1} parent=1 // loop_footer_branch
      %11 = sbr.rel target = $region3
    $region8: #{rpn_head_single.1} parent=1 // loop_exit
      _

</llo_original>
